<compile_context>
chip_gen: v6e
topology: v6e:2x2x1
jax: 0.10.0
libtpu: 0.0.40
codegen_flags: <defaults>
</compile_context>

<pallas_src>
import math
import numpy as np
import jax
import jax.numpy as jnp
from jax import lax
from jax.experimental import pallas as pl
from jax.experimental.pallas import tpu as pltpu


_NEG_FILL = -1e30   # bias fill for padded vocab columns (keeps logsumexp sane)


def _round_up(x, m):
    return ((x + m - 1) // m) * m


def _vmem_capacity_bytes():
    """Physical VMEM of the local TPU; conservative (v7x) fallback."""
    try:
        return int(pltpu.get_tpu_info().vmem_capacity_bytes)
    except Exception:
        return 64 << 20


def _tile_vmem_bytes(tm, tn, dim, x_it, w_it, s_it, emit_scores):
    """VMEM footprint estimate including (8,128) layout padding and the
    double-buffered pipeline copies of every BlockSpec-managed operand."""
    dpad = _round_up(dim, 128)
    b = 0
    b += 2 * tm * dpad * x_it                # x tile (resident, still 2 bufs)
    b += 2 * tn * dpad * w_it                # weight tile (the big HBM stream)
    b += 2 * 8 * tn * 4                      # bias (1, tn) pads to (8, tn) f32
    b += 2 * tm * 128 * 4                    # y (tm, 1) pads to (tm, 128) i32
    if emit_scores:
        b += 2 * tm * tn * s_it              # scores tile
    b += 2 * tm * 128 * 4                    # per-example loss (tm, 1)
    b += 3 * tm * 128 * 4                    # 3 scratch columns (single buf)
    return b


def _select_tiles(N, dim, n_words, x_it, w_it, s_it, emit_scores,
                  vmem_budget, want_tm, want_tn):
    """Pick (tm, tn): prefer big tm (cuts weight re-reads), then big tn
    (cuts grid-step overhead), subject to the VMEM budget and keeping at
    least 2 row tiles so both v7x TensorCores get work."""
    if N < 16:
        tm_cap = _round_up(N, 8)
    else:
        tm_cap = _round_up(-(-N // 2), 8)        # >= 2 row tiles
    tm_cap = max(8, min(tm_cap, _round_up(want_tm, 8)))
    tn_cap = max(128, min(_round_up(n_words, 128), _round_up(want_tn, 128)))

    tm = tm_cap
    while True:
        tn = tn_cap
        while tn >= 128:
            if _tile_vmem_bytes(tm, tn, dim, x_it, w_it, s_it,
                                emit_scores) <= vmem_budget:
                return tm, tn
            tn -= 128
        nxt = max(8, _round_up(tm // 2, 8))
        if nxt == tm:
            break
        tm = nxt
    return 8, 128


def _make_pred_kernel(emit_scores):
    def kernel(x_ref, w_ref, b_ref, y_ref, *rest):
        if emit_scores:
            scores_ref, perex_ref, m_sc, s_sc, t_sc = rest
        else:
            perex_ref, m_sc, s_sc, t_sc = rest

        j = pl.program_id(1)                 # vocab tile index (innermost)

        @pl.when(j == 0)
        def _():
            m_sc[...] = jnp.full_like(m_sc, -jnp.inf)
            s_sc[...] = jnp.zeros_like(s_sc)
            t_sc[...] = jnp.zeros_like(t_sc)

        # (tm, dim) x (tn, dim)^T -> (tm, tn): contract on dim so the weight
        # is consumed in its stored layout; MXU accumulates in f32 even when
        # x / W are bf16.
        logits = lax.dot_general(
            x_ref[...], w_ref[...],
            dimension_numbers=(((1,), (1,)), ((), ())),
            preferred_element_type=jnp.float32)
        logits = logits + b_ref[...].astype(jnp.float32)

        if emit_scores:
            scores_ref[...] = logits.astype(scores_ref.dtype)

        # Online logsumexp over vocab tiles (all elementwise math in f32).
        m_prev = m_sc[...]
        m_new = jnp.maximum(m_prev, logits.max(axis=-1, keepdims=True))
        s_sc[...] = (s_sc[...] * jnp.exp(m_prev - m_new)
                     + jnp.exp(logits - m_new).sum(axis=-1, keepdims=True))
        m_sc[...] = m_new

        # Target-logit gather via one-hot mask; fold the tile offset into y.
        tn = logits.shape[-1]
        col = lax.broadcasted_iota(jnp.int32, logits.shape, 1)
        mask = col == (y_ref[...] - j * tn)          # y_ref: (tm, 1) int32
        t_sc[...] += jnp.sum(jnp.where(mask, logits, 0.0), axis=-1,
                             keepdims=True)

        @pl.when(j == pl.num_programs(1) - 1)
        def _():
            lse = m_sc[...] + jnp.log(s_sc[...])     # (tm, 1)
            perex_ref[...] = lse - t_sc[...]         # per-example CE loss

    return kernel


def pred_layer_forward(x, y, weight, bias, *, pad_index=None,
                       reduction='mean', return_scores=True,
                       compute_dtype=jnp.bfloat16, scores_dtype=jnp.bfloat16,
                       tm=1024, tn=1024):
    """x: (N, dim); y: (N,) int; weight: (n_words, dim); bias: (n_words,).

    Returns (scores, loss).  scores is None when return_scores=False.
    """
    # NOTE: the PyTorch module asserts (y == pad_index).sum() == 0 on the
    # host; that forces a device sync and fails under jit, so it is omitted
    # here (validate y outside the hot path if needed).
    del pad_index

    N, dim = x.shape
    n_words, dim_w = weight.shape
    assert dim == dim_w

    x_it = np.dtype(compute_dtype).itemsize
    w_it = x_it
    s_it = np.dtype(scores_dtype).itemsize

    # Generation-aware VMEM budget: physical capacity minus ~8 MiB headroom
    # for compiler-internal scratch (never clamp v5e/v6e down to 64 MiB).
    budget = max(32 << 20, _vmem_capacity_bytes() - (8 << 20))
    tm_eff, tn_eff = _select_tiles(N, dim, n_words, x_it, w_it, s_it,
                                   return_scores, budget, tm, tn)

    Np = _round_up(N, tm_eff)
    Vp = _round_up(n_words, tn_eff)

    xc = x.astype(compute_dtype)
    wc = weight.astype(compute_dtype)
    yc = y.astype(jnp.int32)
    bc = bias.astype(jnp.float32)

    if Np != N:
        xc = jnp.zeros((Np, dim), compute_dtype).at[:N].set(xc)
        yc = jnp.zeros((Np,), jnp.int32).at[:N].set(yc)
    if Vp != n_words:
        wc = jnp.zeros((Vp, dim), compute_dtype).at[:n_words].set(wc)
        bc = jnp.full((Vp,), _NEG_FILL, jnp.float32).at[:n_words].set(bc)

    y2 = yc.reshape(Np, 1)
    b2 = bc.reshape(1, Vp)

    grid = (Np // tm_eff, Vp // tn_eff)

    footprint = _tile_vmem_bytes(tm_eff, tn_eff, dim, x_it, w_it, s_it,
                                 return_scores)
    vmem_limit = int(min(budget, max(32 << 20, footprint + (4 << 20))))

    out_shapes = []
    out_specs = []
    if return_scores:
        out_shapes.append(jax.ShapeDtypeStruct((Np, Vp), scores_dtype))
        out_specs.append(pl.BlockSpec((tm_eff, tn_eff), lambda i, j: (i, j)))
    out_shapes.append(jax.ShapeDtypeStruct((Np, 1), jnp.float32))
    out_specs.append(pl.BlockSpec((tm_eff, 1), lambda i, j: (i, 0)))

    results = pl.pallas_call(
        _make_pred_kernel(return_scores),
        out_shape=tuple(out_shapes),
        grid_spec=pltpu.PrefetchScalarGridSpec(
            num_scalar_prefetch=0,
            grid=grid,
            in_specs=[
                pl.BlockSpec((tm_eff, dim), lambda i, j: (i, 0)),    # x rows
                # Weight stream; sweep pipeline_mode=pl.Buffered(3) here if an
                # xprof trace still shows exposed weight DMA.
                pl.BlockSpec((tn_eff, dim), lambda i, j: (j, 0)),    # W tile
                pl.BlockSpec((1, tn_eff), lambda i, j: (0, j)),      # bias
                pl.BlockSpec((tm_eff, 1), lambda i, j: (i, 0)),      # targets
            ],
            out_specs=tuple(out_specs),
            scratch_shapes=[
                pltpu.VMEM((tm_eff, 1), jnp.float32),  # running max m
                pltpu.VMEM((tm_eff, 1), jnp.float32),  # running sum-exp s
                pltpu.VMEM((tm_eff, 1), jnp.float32),  # target logit
            ],
        ),
        compiler_params=pltpu.CompilerParams(
            dimension_semantics=("parallel", "arbitrary"),
            vmem_limit_bytes=vmem_limit),
    )(xc, wc, b2, y2)

    if return_scores:
        scores, per_ex = results
        scores = scores[:N, :n_words]
    else:
        per_ex = jax.tree_util.tree_leaves(results)[-1]
        scores = None

    per_ex = per_ex[:N, 0]
    if reduction == 'mean':
        loss = jnp.sum(per_ex) / N
    elif reduction == 'sum':
        loss = jnp.sum(per_ex)
    else:  # 'none'
        loss = per_ex
    return scores, loss


if __name__ == "__main__":
    # Small "params": emb_dim=32, n_words=256, pad_index=0, batch=2, seq=4.
    batch, seq, emb_dim, n_words, pad_index = 2, 4, 32, 256, 0
    N = batch * seq

    key = jax.random.PRNGKey(0)
    kx, kw, kb, ky = jax.random.split(key, 4)

    # Deterministic nn.Linear-style init: U(-1/sqrt(dim), 1/sqrt(dim)).
    bound = 1.0 / math.sqrt(emb_dim)
    weight = jax.random.uniform(kw, (n_words, emb_dim), jnp.float32, -bound, bound)
    bias = jax.random.uniform(kb, (n_words,), jnp.float32, -bound, bound)

    x = jax.random.normal(kx, (N, emb_dim), jnp.float32)
    # Targets avoid pad_index (module contract: no pad tokens in y).
    y = jax.random.randint(ky, (N,), 1, n_words, dtype=jnp.int32)

    # Pure-JAX reference.
    ref_scores = x @ weight.T + bias
    lse = jax.scipy.special.logsumexp(ref_scores, axis=-1)
    ref_loss = jnp.mean(lse - ref_scores[jnp.arange(N), y])

    # 1) f32 compute path: tight check of the kernel structure.
    scores32, loss32 = pred_layer_forward(
        x, y, weight, bias, pad_index=pad_index,
        compute_dtype=jnp.float32, scores_dtype=jnp.float32)
    jax.block_until_ready((scores32, loss32))
    np.testing.assert_allclose(np.asarray(scores32), np.asarray(ref_scores),
                               rtol=1e-5, atol=1e-5)
    np.testing.assert_allclose(float(loss32), float(ref_loss),
                               rtol=1e-5, atol=1e-5)

    # 2) Default fast path (bf16 x/weight + bf16 scores): looser tolerance.
    scores_bf, loss_bf = pred_layer_forward(x, y, weight, bias,
                                            pad_index=pad_index)
    jax.block_until_ready((scores_bf, loss_bf))
    np.testing.assert_allclose(np.asarray(scores_bf, dtype=np.float32),
                               np.asarray(ref_scores), rtol=5e-2, atol=5e-2)
    np.testing.assert_allclose(float(loss_bf), float(ref_loss),
                               rtol=5e-2, atol=5e-2)

    # 3) Non-128-multiple vocab (exercises vocab padding) + loss-only path.
    n_words2 = 200
    w2 = weight[:n_words2]
    b2 = bias[:n_words2]
    y2 = jnp.clip(y, 1, n_words2 - 1)
    _, loss2 = pred_layer_forward(x, y2, w2, b2, pad_index=pad_index,
                                  return_scores=False,
                                  compute_dtype=jnp.float32)
    jax.block_until_ready(loss2)
    ref_s2 = x @ w2.T + b2
    ref_l2 = jnp.mean(jax.scipy.special.logsumexp(ref_s2, axis=-1)
                      - ref_s2[jnp.arange(N), y2])
    np.testing.assert_allclose(float(loss2), float(ref_l2),
                               rtol=1e-5, atol=1e-5)

    print("KERNEL_OK")
</pallas_src>

<mosaic_0001>
module attributes {stable_mosaic.version = 11 : i64} {
  func.func @kernel(%arg0: i32, %arg1: i32, %arg2: memref<8x32xf32, #tpu.memory_space<vmem>>, %arg3: memref<256x32xf32, #tpu.memory_space<vmem>>, %arg4: memref<1x256xf32, #tpu.memory_space<vmem>>, %arg5: memref<8x1xi32, #tpu.memory_space<vmem>>, %arg6: memref<8x256xf32, #tpu.memory_space<vmem>>, %arg7: memref<8x1xf32, #tpu.memory_space<vmem>>, %arg8: memref<8x1xf32, #tpu.memory_space<vmem>>, %arg9: memref<8x1xf32, #tpu.memory_space<vmem>>, %arg10: memref<8x1xf32, #tpu.memory_space<vmem>>) attributes {dimension_semantics = [#tpu.dimension_semantics<parallel>, #tpu.dimension_semantics<arbitrary>], iteration_bounds = array<i64: 1, 1>, scalar_prefetch = 0 : i64, scratch_operands = 3 : i64, tpu.core_type = #tpu.core_type<tc>, window_params = [{transform_indices = @transform_0, window_bounds = array<i64: 8, 32>}, {transform_indices = @transform_1, window_bounds = array<i64: 256, 32>}, {transform_indices = @transform_2, window_bounds = array<i64: 1, 256>}, {transform_indices = @transform_3, window_bounds = array<i64: 8, 1>}, {transform_indices = @transform_4, window_bounds = array<i64: 8, 256>}, {transform_indices = @transform_5, window_bounds = array<i64: 8, 1>}]} {
    %c0_i32 = arith.constant 0 : i32
    %0 = arith.cmpi eq, %arg1, %c0_i32 : i32
    %1 = arith.extui %0 : i1 to i32
    %c0_i32_0 = arith.constant 0 : i32
    %2 = arith.cmpi ne, %1, %c0_i32_0 : i32
    scf.if %2 {
      %cst_28 = arith.constant 0xFF800000 : f32
      %43 = vector.broadcast %cst_28 : f32 to vector<8x1xf32>
      %c0_29 = arith.constant 0 : index
      %c0_30 = arith.constant 0 : index
      %44 = vector.load %arg8[%c0_29, %c0_30] : memref<8x1xf32, #tpu.memory_space<vmem>>, vector<8x1xf32>
      tpu.vector_store %arg8[%c0_29, %c0_30], %43 {strides = array<i32>} : memref<8x1xf32, #tpu.memory_space<vmem>>, vector<8x1xf32>,
      %cst_31 = arith.constant 0.000000e+00 : f32
      %45 = vector.broadcast %cst_31 : f32 to vector<8x1xf32>
      %c0_32 = arith.constant 0 : index
      %c0_33 = arith.constant 0 : index
      %46 = vector.load %arg9[%c0_32, %c0_33] : memref<8x1xf32, #tpu.memory_space<vmem>>, vector<8x1xf32>
      tpu.vector_store %arg9[%c0_32, %c0_33], %45 {strides = array<i32>} : memref<8x1xf32, #tpu.memory_space<vmem>>, vector<8x1xf32>,
      %cst_34 = arith.constant 0.000000e+00 : f32
      %47 = vector.broadcast %cst_34 : f32 to vector<8x1xf32>
      %c0_35 = arith.constant 0 : index
      %c0_36 = arith.constant 0 : index
      %48 = vector.load %arg10[%c0_35, %c0_36] : memref<8x1xf32, #tpu.memory_space<vmem>>, vector<8x1xf32>
      tpu.vector_store %arg10[%c0_35, %c0_36], %47 {strides = array<i32>} : memref<8x1xf32, #tpu.memory_space<vmem>>, vector<8x1xf32>,
    } else {
    }
    %c0 = arith.constant 0 : index
    %c0_1 = arith.constant 0 : index
    %3 = vector.load %arg2[%c0, %c0_1] : memref<8x32xf32, #tpu.memory_space<vmem>>, vector<8x32xf32>
    %c0_2 = arith.constant 0 : index
    %c0_3 = arith.constant 0 : index
    %4 = vector.load %arg3[%c0_2, %c0_3] : memref<256x32xf32, #tpu.memory_space<vmem>>, vector<256x32xf32>
    %cst = arith.constant dense<0.000000e+00> : vector<8x256xf32>
    %5 = tpu.matmul %3, %4, %cst {dimension_numbers = #tpu.dot_dimension_numbers<[1], [1], [0], [0], [0, 0, 1, 0], [], []>} : vector<8x32xf32>, vector<256x32xf32>, vector<8x256xf32> -> vector<8x256xf32>
    %c0_4 = arith.constant 0 : index
    %c0_5 = arith.constant 0 : index
    %6 = vector.load %arg4[%c0_4, %c0_5] : memref<1x256xf32, #tpu.memory_space<vmem>>, vector<1x256xf32>
    %7 = vector.broadcast %6 : vector<1x256xf32> to vector<8x256xf32>
    %8 = arith.addf %5, %7 : vector<8x256xf32>
    %c0_6 = arith.constant 0 : index
    %c0_7 = arith.constant 0 : index
    %9 = vector.load %arg6[%c0_6, %c0_7] : memref<8x256xf32, #tpu.memory_space<vmem>>, vector<8x256xf32>
    tpu.vector_store %arg6[%c0_6, %c0_7], %8 {strides = array<i32>} : memref<8x256xf32, #tpu.memory_space<vmem>>, vector<8x256xf32>,
    %c0_8 = arith.constant 0 : index
    %c0_9 = arith.constant 0 : index
    %10 = vector.load %arg8[%c0_8, %c0_9] : memref<8x1xf32, #tpu.memory_space<vmem>>, vector<8x1xf32>
    %cst_10 = arith.constant dense<0xFF800000> : vector<8xf32>
    %11 = vector.multi_reduction <maximumf>, %8, %cst_10 [1] : vector<8x256xf32> to vector<8xf32>
    %12 = vector.shape_cast %11 : vector<8xf32> to vector<8x1xf32>
    %13 = arith.maximumf %10, %12 : vector<8x1xf32>
    %c0_11 = arith.constant 0 : index
    %c0_12 = arith.constant 0 : index
    %14 = vector.load %arg9[%c0_11, %c0_12] : memref<8x1xf32, #tpu.memory_space<vmem>>, vector<8x1xf32>
    %15 = arith.subf %10, %13 : vector<8x1xf32>
    %16 = math.exp %15 : vector<8x1xf32>
    %17 = arith.mulf %14, %16 : vector<8x1xf32>
    %18 = vector.broadcast %13 : vector<8x1xf32> to vector<8x256xf32>
    %19 = arith.subf %8, %18 : vector<8x256xf32>
    %20 = math.exp %19 : vector<8x256xf32>
    %cst_13 = arith.constant dense<0.000000e+00> : vector<8xf32>
    %21 = vector.multi_reduction <add>, %20, %cst_13 [1] : vector<8x256xf32> to vector<8xf32>
    %22 = vector.shape_cast %21 : vector<8xf32> to vector<8x1xf32>
    %23 = arith.addf %17, %22 : vector<8x1xf32>
    %c0_14 = arith.constant 0 : index
    %c0_15 = arith.constant 0 : index
    %24 = vector.load %arg9[%c0_14, %c0_15] : memref<8x1xf32, #tpu.memory_space<vmem>>, vector<8x1xf32>
    tpu.vector_store %arg9[%c0_14, %c0_15], %23 {strides = array<i32>} : memref<8x1xf32, #tpu.memory_space<vmem>>, vector<8x1xf32>,
    %c0_16 = arith.constant 0 : index
    %c0_17 = arith.constant 0 : index
    %25 = vector.load %arg8[%c0_16, %c0_17] : memref<8x1xf32, #tpu.memory_space<vmem>>, vector<8x1xf32>
    tpu.vector_store %arg8[%c0_16, %c0_17], %13 {strides = array<i32>} : memref<8x1xf32, #tpu.memory_space<vmem>>, vector<8x1xf32>,
    %26 = tpu.iota {dimensions = array<i32: 1>} : vector<8x256xi32>
    %c0_18 = arith.constant 0 : index
    %c0_19 = arith.constant 0 : index
    %27 = vector.load %arg5[%c0_18, %c0_19] : memref<8x1xi32, #tpu.memory_space<vmem>>, vector<8x1xi32>
    %c256_i32 = arith.constant 256 : i32
    %28 = arith.muli %arg1, %c256_i32 : i32
    %29 = vector.broadcast %28 : i32 to vector<8x1xi32>
    %30 = arith.subi %27, %29 : vector<8x1xi32>
    %31 = vector.broadcast %30 : vector<8x1xi32> to vector<8x256xi32>
    %32 = arith.cmpi eq, %26, %31 : vector<8x256xi32>
    %c0_20 = arith.constant 0 : index
    %c0_21 = arith.constant 0 : index
    %33 = vector.load %arg10[%c0_20, %c0_21] : memref<8x1xf32, #tpu.memory_space<vmem>>, vector<8x1xf32>
    %cst_22 = arith.constant 0.000000e+00 : f32
    %34 = vector.broadcast %cst_22 : f32 to vector<8x256xf32>
    %35 = arith.select %32, %8, %34 : vector<8x256xi1>, vector<8x256xf32>
    %cst_23 = arith.constant dense<0.000000e+00> : vector<8xf32>
    %36 = vector.multi_reduction <add>, %35, %cst_23 [1] : vector<8x256xf32> to vector<8xf32>
    %37 = vector.shape_cast %36 : vector<8xf32> to vector<8x1xf32>
    %38 = arith.addf %33, %37 : vector<8x1xf32>
    %c0_24 = arith.constant 0 : index
    %c0_25 = arith.constant 0 : index
    %39 = vector.load %arg10[%c0_24, %c0_25] : memref<8x1xf32, #tpu.memory_space<vmem>>, vector<8x1xf32>
    tpu.vector_store %arg10[%c0_24, %c0_25], %38 {strides = array<i32>} : memref<8x1xf32, #tpu.memory_space<vmem>>, vector<8x1xf32>,
    %c0_i32_26 = arith.constant 0 : i32
    %40 = arith.cmpi eq, %arg1, %c0_i32_26 : i32
    %41 = arith.extui %40 : i1 to i32
    %c0_i32_27 = arith.constant 0 : i32
    %42 = arith.cmpi ne, %41, %c0_i32_27 : i32
    scf.if %42 {
      %c0_28 = arith.constant 0 : index
      %c0_29 = arith.constant 0 : index
      %43 = vector.load %arg8[%c0_28, %c0_29] : memref<8x1xf32, #tpu.memory_space<vmem>>, vector<8x1xf32>
      %c0_30 = arith.constant 0 : index
      %c0_31 = arith.constant 0 : index
      %44 = vector.load %arg9[%c0_30, %c0_31] : memref<8x1xf32, #tpu.memory_space<vmem>>, vector<8x1xf32>
      %45 = math.log %44 : vector<8x1xf32>
      %46 = arith.addf %43, %45 : vector<8x1xf32>
      %c0_32 = arith.constant 0 : index
      %c0_33 = arith.constant 0 : index
      %47 = vector.load %arg10[%c0_32, %c0_33] : memref<8x1xf32, #tpu.memory_space<vmem>>, vector<8x1xf32>
      %48 = arith.subf %46, %47 : vector<8x1xf32>
      %c0_34 = arith.constant 0 : index
      %c0_35 = arith.constant 0 : index
      %49 = vector.load %arg7[%c0_34, %c0_35] : memref<8x1xf32, #tpu.memory_space<vmem>>, vector<8x1xf32>
      tpu.vector_store %arg7[%c0_34, %c0_35], %48 {strides = array<i32>} : memref<8x1xf32, #tpu.memory_space<vmem>>, vector<8x1xf32>,
    } else {
    }
    return
  }
  func.func @transform_0(%arg0: i32, %arg1: i32) -> (i32, i32) {
    %c0_i32 = arith.constant 0 : i32
    %c0_i32_0 = arith.constant 0 : i32
    return %arg0, %c0_i32 : i32, i32
  }
  func.func @transform_1(%arg0: i32, %arg1: i32) -> (i32, i32) {
    %c0_i32 = arith.constant 0 : i32
    %c0_i32_0 = arith.constant 0 : i32
    return %arg1, %c0_i32 : i32, i32
  }
  func.func @transform_2(%arg0: i32, %arg1: i32) -> (i32, i32) {
    %c0_i32 = arith.constant 0 : i32
    %c0_i32_0 = arith.constant 0 : i32
    return %c0_i32, %arg1 : i32, i32
  }
  func.func @transform_3(%arg0: i32, %arg1: i32) -> (i32, i32) {
    %c0_i32 = arith.constant 0 : i32
    %c0_i32_0 = arith.constant 0 : i32
    return %arg0, %c0_i32 : i32, i32
  }
  func.func @transform_4(%arg0: i32, %arg1: i32) -> (i32, i32) {
    %c0_i32 = arith.constant 0 : i32
    return %arg0, %arg1 : i32, i32
  }
  func.func @transform_5(%arg0: i32, %arg1: i32) -> (i32, i32) {
    %c0_i32 = arith.constant 0 : i32
    %c0_i32_0 = arith.constant 0 : i32
    return %arg0, %c0_i32 : i32, i32
  }
}

</mosaic_0001>

<llo_original>
// kernel: tpu_custom_call.1
$region0: #{tpu_custom_call.1}
  #allocation0 [shape = 'u32[]', space=smem, size = 0x4, offset = 0x4, fixed_abs, tag = 'smem constant byte address 0x4 - core index']
  #allocation1 [shape = 'u32[144,128]{1,0:T(1,128)}', space=vmem, size = 0x12000, scoped, tag = 'internal scratch']
  #allocation2 [shape = 'f32[8,1]{1,0:T(8,128)}', space=vmem, size = 0x1000, scoped, tag = 'scratch operand']
  #allocation3 [shape = 'f32[8,1]{1,0:T(8,128)}', space=vmem, size = 0x1000, scoped, tag = 'scratch operand']
  #allocation4 [shape = 'f32[8,1]{1,0:T(8,128)}', space=vmem, size = 0x1000, scoped, tag = 'scratch operand']
  %s0 = inlined_call_operand.vmem [shape: f32[8,32], index: 0, kind: input, shape index: {}]
  %s1 = inlined_call_operand.vmem [shape: f32[256,32], index: 1, kind: input, shape index: {}]
  %s2 = inlined_call_operand.vmem [shape: f32[1,256], index: 2, kind: input, shape index: {}]
  %s3 = inlined_call_operand.vmem [shape: s32[8,1], index: 3, kind: input, shape index: {}]
  %s4 = inlined_call_operand.hbm [shape: f32[8,256], index: 4, kind: output, shape index: {0}]
  %s5 = inlined_call_operand.vmem [shape: f32[8,1], index: 5, kind: output, shape index: {1}]
  %6 = xla_tuple %s4, %s5
  %s7 = sld [smem:[#allocation0]]
  $region42: #{tpu_custom_call.1} parent=0
    _
  %s9 = ssub.s32 1, %s7
  %s10 = scalar_select 0, %s9, %s7
  $region1: #{tpu_custom_call.1} parent=0
    #allocation5 [shape = 'u8[8192]{0}', space=vmem, size = 0x2000, scoped, tag = 'output window, operand 0, single buffered']
    #allocation6 [shape = 's32[1]{0}', space=sflag, size = 0x4, scoped, tag = 'scoped memory for tpu_custom_call.1']
    %11 = vsyncpa [#allocation6], 0
    // Predicated region
    $region2: #{tpu_custom_call.1} parent=1 // pred_check
      _
    $region3: #{tpu_custom_call.1} parent=1 // pred_check_branch
      %13 = sbr.rel (0) target = $region5
    $region4: #{tpu_custom_call.1} parent=1 // pred_region
      _
    $region5: #{tpu_custom_call.1} parent=1 // pred_fallthru
      _
    // Predicated region
    $region6: #{tpu_custom_call.1} parent=1 // pred_check
      _
    $region7: #{tpu_custom_call.1} parent=1 // pred_check_branch
      %15 = sbr.rel (0) target = $region9
    $region8: #{tpu_custom_call.1} parent=1 // pred_region
      _
    $region9: #{tpu_custom_call.1} parent=1 // pred_fallthru
      _
    // Predicated region
    $region10: #{tpu_custom_call.1} parent=1 // pred_check
      _
    $region11: #{tpu_custom_call.1} parent=1 // pred_check_branch
      %17 = sbr.rel (0) target = $region13
    $region12: #{tpu_custom_call.1} parent=1 // pred_region
      _
    $region13: #{tpu_custom_call.1} parent=1 // pred_fallthru
      _
    // Predicated region
    $region14: #{tpu_custom_call.1} parent=1 // pred_check
      _
    $region15: #{tpu_custom_call.1} parent=1 // pred_check_branch
      %19 = sbr.rel (0) target = $region17
    $region16: #{tpu_custom_call.1} parent=1 // pred_region
      _
    $region17: #{tpu_custom_call.1} parent=1 // pred_fallthru
      _
    %p20 = scmp.eq.s32.totalorder 0, 0
    // Predicated region
    $region18: #{tpu_custom_call.1} parent=1 // pred_check
      %p21 = pneg %p20
    $region19: #{tpu_custom_call.1} parent=1 // pred_check_branch
      %23 = sbr.rel (%p21) target = $region21
    $region20: #{tpu_custom_call.1} parent=1 // pred_region
      %vm24 = vcmask 7168
      %25 = vst.msk [vmem:[#allocation2] sm:$0xff] %vm24, -inf
      %26 = vst.msk [vmem:[#allocation3] sm:$0xff] %vm24, 0.0
      %27 = vst.msk [vmem:[#allocation4] sm:$0xff] %vm24, 0.0
    $region21: #{tpu_custom_call.1} parent=1 // pred_fallthru
      _
    %v28 = vld [vmem:[%s0] sm:$0xff]
    %v29 = vld [vmem:[%s1] sm:$0xff]
    %v30 = vld [vmem:[%s1 + $0x8] sm:$0xff]
    %v31 = vld [vmem:[%s1 + $0x10] sm:$0xff]
    %v32 = vld [vmem:[%s1 + $0x18] sm:$0xff]
    %v33 = vld [vmem:[%s1 + $0x20] sm:$0xff]
    %v34 = vld [vmem:[%s1 + $0x28] sm:$0xff]
    %v35 = vld [vmem:[%s1 + $0x30] sm:$0xff]
    %v36 = vld [vmem:[%s1 + $0x38] sm:$0xff]
    %v37 = vld [vmem:[%s1 + $0x40] sm:$0xff]
    %v38 = vld [vmem:[%s1 + $0x48] sm:$0xff]
    %v39 = vld [vmem:[%s1 + $0x50] sm:$0xff]
    %v40 = vld [vmem:[%s1 + $0x58] sm:$0xff]
    %v41 = vld [vmem:[%s1 + $0x60] sm:$0xff]
    %v42 = vld [vmem:[%s1 + $0x68] sm:$0xff]
    %v43 = vld [vmem:[%s1 + $0x70] sm:$0xff]
    %v44 = vld [vmem:[%s1 + $0x78] sm:$0xff]
    %v45 = vld [vmem:[%s1 + $0x80] sm:$0xff]
    %v46 = vld [vmem:[%s1 + $0x88] sm:$0xff]
    %v47 = vld [vmem:[%s1 + $0x90] sm:$0xff]
    %v48 = vld [vmem:[%s1 + $0x98] sm:$0xff]
    %v49 = vld [vmem:[%s1 + $0xa0] sm:$0xff]
    %v50 = vld [vmem:[%s1 + $0xa8] sm:$0xff]
    %v51 = vld [vmem:[%s1 + $0xb0] sm:$0xff]
    %v52 = vld [vmem:[%s1 + $0xb8] sm:$0xff]
    %v53 = vld [vmem:[%s1 + $0xc0] sm:$0xff]
    %v54 = vld [vmem:[%s1 + $0xc8] sm:$0xff]
    %v55 = vld [vmem:[%s1 + $0xd0] sm:$0xff]
    %v56 = vld [vmem:[%s1 + $0xd8] sm:$0xff]
    %v57 = vld [vmem:[%s1 + $0xe0] sm:$0xff]
    %v58 = vld [vmem:[%s1 + $0xe8] sm:$0xff]
    %v59 = vld [vmem:[%s1 + $0xf0] sm:$0xff]
    %v60 = vld [vmem:[%s1 + $0xf8] sm:$0xff]
    %v61 = vld [vmem:[%s2] sm:$0x3]
    %v63 = vlaneseq
    %v64 = vshrl.u32 %v63, 7
    %v65 = vsub.s32 0, %v64
    %v66 = vrot.slane %v61, %v65
    %v67 = vlaneseq
    %v68 = vshrl.u32 %v67, 7
    %v69 = vsub.s32 1, %v68
    %v70 = vrot.slane %v61, %v69
    %vm73 = vcmask 261120
    %v75 = vsel %vm73, %v28, 0
    %v78 = vsel %vm73, %v29, 0
    %v81 = vsel %vm73, %v30, 0
    %v84 = vsel %vm73, %v31, 0
    %v87 = vsel %vm73, %v32, 0
    %v90 = vsel %vm73, %v33, 0
    %v93 = vsel %vm73, %v34, 0
    %v96 = vsel %vm73, %v35, 0
    %v99 = vsel %vm73, %v36, 0
    %v102 = vsel %vm73, %v37, 0
    %v105 = vsel %vm73, %v38, 0
    %v108 = vsel %vm73, %v39, 0
    %v111 = vsel %vm73, %v40, 0
    %v114 = vsel %vm73, %v41, 0
    %v117 = vsel %vm73, %v42, 0
    %v120 = vsel %vm73, %v43, 0
    %v123 = vsel %vm73, %v44, 0
    %v126 = vsel %vm73, %v45, 0
    %v129 = vsel %vm73, %v46, 0
    %v132 = vsel %vm73, %v47, 0
    %v135 = vsel %vm73, %v48, 0
    %v138 = vsel %vm73, %v49, 0
    %v141 = vsel %vm73, %v50, 0
    %v144 = vsel %vm73, %v51, 0
    %v147 = vsel %vm73, %v52, 0
    %v150 = vsel %vm73, %v53, 0
    %v153 = vsel %vm73, %v54, 0
    %v156 = vsel %vm73, %v55, 0
    %v159 = vsel %vm73, %v56, 0
    %v162 = vsel %vm73, %v57, 0
    %v165 = vsel %vm73, %v58, 0
    %v168 = vsel %vm73, %v59, 0
    %v171 = vsel %vm73, %v60, 0
    %173 = vmatprep.subr.mxu0 0.0
    %174 = vmatpush1.xpose.msra.mxu0 %v123
    %175 = vmatprep.subr.mxu0 0.0
    %176 = vmatpush1.xpose.msra.mxu0 %v120
    %177 = vmatprep.subr.mxu0 0.0
    %178 = vmatpush1.xpose.msra.mxu0 %v117
    %179 = vmatprep.subr.mxu0 0.0
    %180 = vmatpush1.xpose.msra.mxu0 %v114
    %181 = vmatprep.subr.mxu0 0.0
    %182 = vmatpush1.xpose.msra.mxu0 %v111
    %183 = vmatprep.subr.mxu0 0.0
    %184 = vmatpush1.xpose.msra.mxu0 %v108
    %185 = vmatprep.subr.mxu0 0.0
    %186 = vmatpush1.xpose.msra.mxu0 %v105
    %187 = vmatprep.subr.mxu0 0.0
    %188 = vmatpush1.xpose.msra.mxu0 %v102
    %189 = vmatprep.subr.mxu0 0.0
    %190 = vmatpush1.xpose.msra.mxu0 %v99
    %191 = vmatprep.subr.mxu0 0.0
    %192 = vmatpush1.xpose.msra.mxu0 %v96
    %193 = vmatprep.subr.mxu0 0.0
    %194 = vmatpush1.xpose.msra.mxu0 %v93
    %195 = vmatprep.subr.mxu0 0.0
    %196 = vmatpush1.xpose.msra.mxu0 %v90
    %197 = vmatprep.subr.mxu0 0.0
    %198 = vmatpush1.xpose.msra.mxu0 %v87
    %199 = vmatprep.subr.mxu0 0.0
    %200 = vmatpush1.xpose.msra.mxu0 %v84
    %201 = vmatprep.subr.mxu0 0.0
    %202 = vmatpush1.xpose.msra.mxu0 %v81
    %203 = vmatprep.subr.mxu0 0.0
    %204 = vmatpush1.xpose.msra.mxu0 %v78
    %205 = vmatprep.subr.mxu0 0.0
    %206 = vmatpush2.xpose.msra.mxu0 %v171
    %207 = vmatprep.subr.mxu0 0.0
    %208 = vmatpush2.xpose.msra.mxu0 %v168
    %209 = vmatprep.subr.mxu0 0.0
    %210 = vmatpush2.xpose.msra.mxu0 %v165
    %211 = vmatprep.subr.mxu0 0.0
    %212 = vmatpush2.xpose.msra.mxu0 %v162
    %213 = vmatprep.subr.mxu0 0.0
    %214 = vmatpush2.xpose.msra.mxu0 %v159
    %215 = vmatprep.subr.mxu0 0.0
    %216 = vmatpush2.xpose.msra.mxu0 %v156
    %217 = vmatprep.subr.mxu0 0.0
    %218 = vmatpush2.xpose.msra.mxu0 %v153
    %219 = vmatprep.subr.mxu0 0.0
    %220 = vmatpush2.xpose.msra.mxu0 %v150
    %221 = vmatprep.subr.mxu0 0.0
    %222 = vmatpush2.xpose.msra.mxu0 %v147
    %223 = vmatprep.subr.mxu0 0.0
    %224 = vmatpush2.xpose.msra.mxu0 %v144
    %225 = vmatprep.subr.mxu0 0.0
    %226 = vmatpush2.xpose.msra.mxu0 %v141
    %227 = vmatprep.subr.mxu0 0.0
    %228 = vmatpush2.xpose.msra.mxu0 %v138
    %229 = vmatprep.subr.mxu0 0.0
    %230 = vmatpush2.xpose.msra.mxu0 %v135
    %231 = vmatprep.subr.mxu0 0.0
    %232 = vmatpush2.xpose.msra.mxu0 %v132
    %233 = vmatprep.subr.mxu0 0.0
    %234 = vmatpush2.xpose.msra.mxu0 %v129
    %235 = vmatprep.subr.mxu0 0.0
    %236 = vmatpush2.xpose.msra.mxu0 %v126
    %237 = vmatprep.mubr.f32.mxu0 0.0
    %238 = vmatmul.mubr.f32.gmra.mxu0 %v75
    %v239 = vpop.f32.mrf.mxu0
    %v240 = vadd.f32 %v66, %v239
    %v241 = vpop.f32.mrf.mxu0
    %v242 = vadd.f32 %v70, %v241
    %243 = vdwg.mxu0
    %244 = vst [vmem:[#allocation5] sm:$0xff] %v240
    %245 = vst [vmem:[#allocation5 + $0x8] sm:$0xff] %v242
    %v246 = vld [vmem:[#allocation2] sm:$0xff]
    %v247 = vmax.f32 %v240, %v242
    %248 = vmax.xlane.f32.xlu0 %v247
    %v249 = vpop.xlane.xlu0 %248
    %v250 = vmax.f32 %v246, %v249
    %v251 = vld [vmem:[#allocation3] sm:$0xff]
    %v252 = vsub.f32 %v246, %v250
    %v253 = vmul.f32 %v252, 1.442695
    %v254 = vpow.pop %v253
    %v255 = vmul.f32 %v251, %v254
    %257 = vset.pattern.permute.xlu0 0
    %258 = vperm.xlu0 %257, %v250
    %v259 = vpop.permute.xlu0 %258
    %v261 = vsub.f32 %v240, %v259
    %v262 = vsub.f32 %v242, %v259
    %v263 = vmul.f32 %v261, 1.442695
    %v264 = vpow.pop %v263
    %v265 = vmul.f32 %v262, 1.442695
    %v266 = vpow.pop %v265
    %v267 = vadd.f32 %v264, %v266
    %268 = vadd.xlane.f32.xlu0 %v267
    %v269 = vpop.xlane.xlu0 %268
    %v270 = vadd.f32 %v255, %v269
    %vm271 = vcmask 7168
    %272 = vst.msk [vmem:[#allocation3] sm:$0xff] %vm271, %v270
    %273 = vst.msk [vmem:[#allocation2] sm:$0xff] %vm271, %v250
    %v274 = vlaneseq
    %v275 = vand.u32 %v274, 127
    %v276 = vadd.s32 %v275, 128
    %v277 = vld [vmem:[%s3] sm:$0xff]
    %s278 = smul.u32 0, 256
    %v279 = vstv %s278
    %v280 = vsub.s32 %v277, %v279
    %281 = vset.pattern.permute.xlu0 0
    %282 = vperm.xlu0 %281, %v280
    %v283 = vpop.permute.xlu0 %282
    %vm284 = vcmp.eq.s32.totalorder %v275, %v283
    %vm285 = vcmp.eq.s32.totalorder %v276, %v283
    %v286 = vld [vmem:[#allocation4] sm:$0xff]
    %v287 = vsel %vm284, %v240, 0.0
    %v288 = vsel %vm285, %v242, 0.0
    %v289 = vadd.f32 %v287, %v288
    %290 = vadd.xlane.f32.xlu0 %v289
    %v291 = vpop.xlane.xlu0 %290
    %v292 = vadd.f32 %v286, %v291
    %293 = vst.msk [vmem:[#allocation4] sm:$0xff] %vm271, %v292
    // Predicated region
    $region22: #{tpu_custom_call.1} parent=1 // pred_check
      %p294 = pneg %p20
    $region23: #{tpu_custom_call.1} parent=1 // pred_check_branch
      %296 = sbr.rel (%p294) target = $region25
    $region24: #{tpu_custom_call.1} parent=1 // pred_region
      %v297 = vld [vmem:[#allocation2] sm:$0xff]
      %v298 = vld [vmem:[#allocation3] sm:$0xff]
      %v299 = vlog2.pop %v298
      %v300 = vmul.f32 %v299, 0.6931472
      %v301 = vadd.f32 %v297, %v300
      %v302 = vld [vmem:[#allocation4] sm:$0xff]
      %v303 = vsub.f32 %v301, %v302
      %304 = vst.msk [vmem:[%s5] sm:$0xff] %vm271, %v303
    $region25: #{tpu_custom_call.1} parent=1 // pred_fallthru
      _
    // Predicated region
    $region26: #{tpu_custom_call.1} parent=1 // pred_check
      _
    $region27: #{tpu_custom_call.1} parent=1 // pred_check_branch
      %306 = sbr.rel (0) target = $region29
    $region28: #{tpu_custom_call.1} parent=1 // pred_region
      %s308 = ssub.s32 256, 256
      %309 = vsyncadd [#allocation6], %s308
      %s311 = sshll.u32 [#allocation5], 4
      %s312 = int_to_ptr.vmem [resolvable:$true] %s311
      %314 = dma.vmem_to_hbm [thread:$0]  %s312, 256, %s4, [#allocation6]
    $region29: #{tpu_custom_call.1} parent=1 // pred_fallthru
      _
    // Predicated region
    $region30: #{tpu_custom_call.1} parent=1 // pred_check
      _
    $region31: #{tpu_custom_call.1} parent=1 // pred_check_branch
      %316 = sbr.rel (0) target = $region33
    $region32: #{tpu_custom_call.1} parent=1 // pred_region
      _
    $region33: #{tpu_custom_call.1} parent=1 // pred_fallthru
      _
    // Predicated region
    $region34: #{tpu_custom_call.1} parent=1 // pred_check
      _
    $region35: #{tpu_custom_call.1} parent=1 // pred_check_branch
      %318 = sbr.rel (0) target = $region37
    $region36: #{tpu_custom_call.1} parent=1 // pred_region
      %319 = dma.done [#allocation6], 256
    $region37: #{tpu_custom_call.1} parent=1 // pred_fallthru
      _
    // Predicated region
    $region38: #{tpu_custom_call.1} parent=1 // pred_check
      _
    $region39: #{tpu_custom_call.1} parent=1 // pred_check_branch
      %321 = sbr.rel (0) target = $region41
    $region40: #{tpu_custom_call.1} parent=1 // pred_region
      _
    $region41: #{tpu_custom_call.1} parent=1 // pred_fallthru
      _
    %322 = vsyncpa [#allocation6], 1

</llo_original>
